<compile_context>
chip_gen: v5e
topology: v5e:2x2
jax: 0.10.0
libtpu: 0.0.40
codegen_flags: <defaults>
</compile_context>

<pallas_src>
import math
import functools

import jax
import jax.numpy as jnp
from jax import lax
from jax.experimental import pallas as pl
from jax.experimental.pallas import tpu as pltpu

# TODO(synk): ab_HL_subclass is not defined in the reference snippet; using 9 classes.
NUM_SUBCLASS = 9
LAYER_NORM_EPS = 1e-12
IGNORE_INDEX = -1
WEIGHT_SUBCLASS_LOSS = 0.0

_INV_SQRT2 = 1.0 / math.sqrt(2.0)


def _round_up(x, m):
    return ((x + m - 1) // m) * m


def _gelu_exact(x):
    # x * 0.5 * (1 + erf(x / sqrt(2)))  -- matches PyTorch `gelu` in the spec.
    return x * 0.5 * (1.0 + jax.scipy.special.erf(x * _INV_SQRT2))


def _layer_norm(h, w, b):
    u = jnp.mean(h, axis=-1, keepdims=True)
    s = jnp.mean((h - u) ** 2, axis=-1, keepdims=True)
    h = (h - u) * lax.rsqrt(s + LAYER_NORM_EPS)
    return w * h + b


# ---------------------------------------------------------------------------
# Token-path kernel: (B*S, H) -> (B*S, V) bf16 logits + (B*S, 1) f32 logsumexp
#   grid = (row tiles i [parallel], vocab tiles j [arbitrary, innermost]).
#   The dense->GELU->LN transform is computed once per row tile (j == 0) into a
#   VMEM scratch and reused across all vocab tiles; an online logsumexp is
#   accumulated across j so the loss never re-reads the logits.
# ---------------------------------------------------------------------------
def _token_kernel(x_ref, w1_ref, b1_ref, lnw_ref, lnb_ref, wd_ref, db_ref,
                  logits_ref, lse_ref, h_ref, m_ref, l_ref, *, vocab, tn):
    j = pl.program_id(1)

    @pl.when(j == 0)
    def _():
        # In-kernel bf16 cast of x (rides a VPU slot; no standalone XLA pass).
        x = x_ref[...].astype(jnp.bfloat16)
        h = jnp.dot(x, w1_ref[...], preferred_element_type=jnp.float32)
        h = _gelu_exact(h + b1_ref[...])
        h = _layer_norm(h, lnw_ref[...], lnb_ref[...])
        # NOTE: rows beyond bs (padded row tile) hold garbage/NaN here; they are
        # row-independent and dropped by the masked output writeback.
        h_ref[...] = h.astype(h_ref.dtype)        # cached bf16 for the decoder matmul
        m_ref[...] = jnp.full_like(m_ref, -jnp.inf)
        l_ref[...] = jnp.zeros_like(l_ref)

    logits = jnp.dot(h_ref[...], wd_ref[...], preferred_element_type=jnp.float32)
    logits = logits + db_ref[...]
    logits_ref[...] = logits.astype(logits_ref.dtype)   # bf16 writeback (lane-dense)

    # Online logsumexp across vocab tiles; mask pad columns of a ragged last tile.
    if vocab % tn != 0:
        col = lax.broadcasted_iota(jnp.int32, logits.shape, 1) + j * tn
        logits = jnp.where(col < vocab, logits, -jnp.inf)
    m_new = jnp.maximum(m_ref[...], logits.max(axis=-1, keepdims=True))
    l_ref[...] = (l_ref[...] * jnp.exp(m_ref[...] - m_new)
                  + jnp.exp(logits - m_new).sum(axis=-1, keepdims=True))
    m_ref[...] = m_new

    @pl.when(j == pl.num_programs(1) - 1)
    def _():
        lse_ref[...] = m_ref[...] + jnp.log(l_ref[...])


def _tile_config():
    """Per-generation (tm, tn, vmem_limit_bytes). Conservative fallback."""
    tm, tn, vmem = 512, 1024, 48 * 1024 * 1024          # safe for v7x's 64 MiB VMEM
    try:
        info = pltpu.get_tpu_info()
        cap = getattr(info, "vmem_capacity_bytes", None)
        if cap is not None and cap >= 100 * 1024 * 1024:
            # v5e / v6e: 128 MiB VMEM -> bigger tiles, fewer grid steps.
            tm, tn, vmem = 1024, 2048, 100 * 1024 * 1024
    except Exception:
        pass
    return tm, tn, vmem


def token_head(x_flat, w1, b1, ln_w, ln_b, w_dec, dec_bias, *, tm=None, tn=None):
    bs, hdim = x_flat.shape
    vocab = w_dec.shape[1]

    tm_d, tn_d, vmem_limit = _tile_config()
    tm = tm_d if tm is None else tm
    tn = tn_d if tn is None else tn

    tm = min(tm, _round_up(bs, 8))          # keep sublane-aligned for small inputs
    tn = vocab if vocab <= tn else tn       # full when small, else 128-multiple tiles

    grid = (pl.cdiv(bs, tm), pl.cdiv(vocab, tn))
    inv = lambda i, j: (0, 0)               # grid-invariant operands

    kernel = functools.partial(_token_kernel, vocab=vocab, tn=tn)

    logits, lse = pl.pallas_call(
        kernel,
        out_shape=(jax.ShapeDtypeStruct((bs, vocab), jnp.bfloat16),
                   jax.ShapeDtypeStruct((bs, 1), jnp.float32)),
        grid_spec=pltpu.PrefetchScalarGridSpec(
            num_scalar_prefetch=0,
            grid=grid,
            in_specs=[
                pl.BlockSpec((tm, hdim), lambda i, j: (i, 0)),   # x rows (f32, cast in-kernel)
                pl.BlockSpec((hdim, hdim), inv),                 # tok_w1 (bf16, resident)
                pl.BlockSpec((1, hdim), inv),                    # tok_b1 (f32)
                pl.BlockSpec((1, hdim), inv),                    # ln weight (f32)
                pl.BlockSpec((1, hdim), inv),                    # ln bias (f32)
                pl.BlockSpec((hdim, tn), lambda i, j: (0, j)),   # dec_w vocab tile (bf16)
                pl.BlockSpec((1, tn), lambda i, j: (0, j)),      # decoder bias vocab tile
            ],
            out_specs=(pl.BlockSpec((tm, tn), lambda i, j: (i, j)),   # bf16 logits
                       pl.BlockSpec((tm, 1), lambda i, j: (i, 0))),   # f32 logsumexp
            scratch_shapes=[pltpu.VMEM((tm, hdim), jnp.bfloat16),     # cached transform h
                            pltpu.VMEM((tm, 1), jnp.float32),         # running max
                            pltpu.VMEM((tm, 1), jnp.float32)],        # running sum-exp
        ),
        compiler_params=pltpu.CompilerParams(
            # j (vocab) must stay the innermost "arbitrary" axis: the h/m/l
            # scratch reuse and the lse accumulation depend on it.
            dimension_semantics=("parallel", "arbitrary"),
            vmem_limit_bytes=vmem_limit,
        ),
    )(x_flat, w1, b1, ln_w, ln_b, w_dec, dec_bias)
    return logits, lse


# ---------------------------------------------------------------------------
# Subclass path: (B, H) -> (B, NUM_SUBCLASS), plain XLA per the perf review
# (negligible FLOPs; a Pallas launch would pin a second (H,H) weight in VMEM
#  and emit masked 9-lane stores).
# ---------------------------------------------------------------------------
def subclass_head(x0, w1, b1, ln_w, ln_b, w_pred, b_pred):
    h = jnp.dot(x0.astype(jnp.bfloat16), w1, preferred_element_type=jnp.float32) + b1
    h = _gelu_exact(h)
    h = _layer_norm(h, ln_w, ln_b)
    # TODO(synk): nn.Dropout is identity in eval mode; training-mode dropout not implemented.
    return jnp.dot(h.astype(jnp.bfloat16), w_pred,
                   preferred_element_type=jnp.float32) + b_pred


# ---------------------------------------------------------------------------
# Glue: cross-entropy losses + full forward
# ---------------------------------------------------------------------------
def _cross_entropy_full(logits, targets, ignore_index):
    v = logits.shape[-1]
    logits = logits.reshape(-1, v).astype(jnp.float32)
    targets = targets.reshape(-1)
    valid = targets != ignore_index
    safe_t = jnp.where(valid, targets, 0)
    logz = jax.nn.logsumexp(logits, axis=-1)
    tgt = jnp.take_along_axis(logits, safe_t[:, None], axis=-1)[:, 0]
    nll = jnp.where(valid, logz - tgt, 0.0)
    denom = jnp.maximum(valid.sum(), 1)
    return nll.sum() / denom.astype(jnp.float32)


def _cross_entropy_from_lse(logits, lse, targets, ignore_index):
    # logits: (N, V) bf16, lse: (N,) f32 (fused in-kernel logsumexp).
    targets = targets.reshape(-1)
    valid = targets != ignore_index
    safe_t = jnp.where(valid, targets, 0)
    tgt = jnp.take_along_axis(logits, safe_t[:, None], axis=-1)[:, 0].astype(jnp.float32)
    nll = jnp.where(valid, lse - tgt, 0.0)
    denom = jnp.maximum(valid.sum(), 1)
    return nll.sum() / denom.astype(jnp.float32)


@jax.jit
def abseq_concate_head_forward(params, hidden_states, targets, targets_subclass):
    b, s, h = hidden_states.shape
    x_flat = hidden_states.reshape(b * s, h)

    logits_flat, lse_flat = token_head(
        x_flat,
        params["tok_w1"], params["tok_b1"],
        params["tok_ln_w"], params["tok_ln_b"],
        params["dec_w"], params["dec_bias"],
    )
    token_states = logits_flat.reshape(b, s, -1)      # bf16 (perf decision)

    subclass_states = subclass_head(
        hidden_states[:, 0],
        params["sub_w1"], params["sub_b1"],
        params["sub_ln_w"], params["sub_ln_b"],
        params["pred_w"], params["pred_b"],
    )

    lm_loss = _cross_entropy_from_lse(logits_flat, lse_flat[:, 0], targets, IGNORE_INDEX)
    sub_loss = _cross_entropy_full(subclass_states, targets_subclass, IGNORE_INDEX)
    loss = lm_loss + WEIGHT_SUBCLASS_LOSS * sub_loss
    metrics = {
        "perplexity": jnp.exp(lm_loss),
        "perplexity_subC_pair": jnp.exp(sub_loss),
    }
    return (loss, metrics), token_states, subclass_states


def init_params(key, hidden_size, vocab_size):
    ks = jax.random.split(key, 4)
    sc = 0.02
    bf = jnp.bfloat16   # MXU-native operand dtype; accumulation stays f32
    return {
        # transform_token
        "tok_w1": (sc * jax.random.normal(ks[0], (hidden_size, hidden_size), jnp.float32)).astype(bf),
        "tok_b1": jnp.zeros((1, hidden_size), jnp.float32),
        "tok_ln_w": jnp.ones((1, hidden_size), jnp.float32),
        "tok_ln_b": jnp.zeros((1, hidden_size), jnp.float32),
        # decoder (no bias) + separate bias parameter
        "dec_w": (sc * jax.random.normal(ks[1], (hidden_size, vocab_size), jnp.float32)).astype(bf),
        "dec_bias": jnp.zeros((1, vocab_size), jnp.float32),
        # transform_subClassHLPair
        "sub_w1": (sc * jax.random.normal(ks[2], (hidden_size, hidden_size), jnp.float32)).astype(bf),
        "sub_b1": jnp.zeros((1, hidden_size), jnp.float32),
        "sub_ln_w": jnp.ones((1, hidden_size), jnp.float32),
        "sub_ln_b": jnp.zeros((1, hidden_size), jnp.float32),
        # pred_subClassHLPair
        "pred_w": (sc * jax.random.normal(ks[3], (hidden_size, NUM_SUBCLASS), jnp.float32)).astype(bf),
        "pred_b": jnp.zeros((1, NUM_SUBCLASS), jnp.float32),
    }


def _token_ref(x_flat, w1, b1, ln_w, ln_b, w_dec, dec_bias):
    # Pure-JAX reference with the same bf16-operand / f32-accumulate recipe.
    h = jnp.dot(x_flat.astype(jnp.bfloat16), w1, preferred_element_type=jnp.float32) + b1
    h = _gelu_exact(h)
    h = _layer_norm(h, ln_w, ln_b)
    return jnp.dot(h.astype(jnp.bfloat16), w_dec,
                   preferred_element_type=jnp.float32) + dec_bias


if __name__ == "__main__":
    B, S, H, V = 2, 8, 32, 256

    key = jax.random.PRNGKey(0)
    k_x, k_t, k_s, k_p, k_r = jax.random.split(key, 5)

    hidden_states = jax.random.normal(k_x, (B, S, H), jnp.float32)
    targets = jax.random.randint(k_t, (B, S), 0, V)
    targets = targets.at[0, 0].set(IGNORE_INDEX).at[1, 3].set(IGNORE_INDEX)
    targets_subclass = jax.random.randint(k_s, (B,), 0, NUM_SUBCLASS)

    params = init_params(k_p, H, V)

    (loss, metrics), token_states, subclass_states = jax.block_until_ready(
        abseq_concate_head_forward(params, hidden_states, targets, targets_subclass)
    )

    assert token_states.shape == (B, S, V)
    assert subclass_states.shape == (B, NUM_SUBCLASS)
    assert jnp.isfinite(loss)
    assert jnp.isfinite(metrics["perplexity"])
    assert jnp.isfinite(metrics["perplexity_subC_pair"])

    # Cross-check logits / fused logsumexp / loss against a pure-JAX reference.
    x_flat = hidden_states.reshape(B * S, H)
    args = (x_flat, params["tok_w1"], params["tok_b1"], params["tok_ln_w"],
            params["tok_ln_b"], params["dec_w"], params["dec_bias"])
    ref = _token_ref(*args)                                   # f32 logits
    ref_lse = jax.nn.logsumexp(ref, axis=-1)
    ref_lm_loss = _cross_entropy_full(ref, targets, IGNORE_INDEX)
    assert jnp.allclose(token_states.reshape(B * S, V).astype(jnp.float32), ref,
                        atol=2e-2, rtol=2e-2)                  # bf16 output quantization
    assert abs(float(loss) - float(ref_lm_loss)) < 5e-3

    # Exercise the multi-tile (row + vocab) pipeline path: scratch reuse across
    # vocab tiles and the online logsumexp accumulation.
    logits_tiled, lse_tiled = jax.block_until_ready(
        jax.jit(functools.partial(token_head, tm=8, tn=128))(*args)
    )
    assert jnp.allclose(logits_tiled.astype(jnp.float32),
                        token_states.reshape(B * S, V).astype(jnp.float32),
                        atol=2e-2, rtol=2e-2)
    assert jnp.allclose(logits_tiled.astype(jnp.float32), ref, atol=2e-2, rtol=2e-2)
    assert jnp.allclose(lse_tiled[:, 0], ref_lse, atol=1e-2, rtol=1e-3)

    # Exercise the ragged-vocab path (vocab % tn != 0): pad columns must be
    # masked out of the logsumexp and dropped by the masked writeback.
    V2 = 200
    dec_w2 = (0.02 * jax.random.normal(k_r, (H, V2), jnp.float32)).astype(jnp.bfloat16)
    dec_b2 = jnp.zeros((1, V2), jnp.float32)
    args2 = (x_flat, params["tok_w1"], params["tok_b1"], params["tok_ln_w"],
             params["tok_ln_b"], dec_w2, dec_b2)
    logits_r, lse_r = jax.block_until_ready(
        jax.jit(functools.partial(token_head, tm=8, tn=128))(*args2)
    )
    ref2 = _token_ref(*args2)
    assert logits_r.shape == (B * S, V2)
    assert jnp.allclose(logits_r.astype(jnp.float32), ref2, atol=2e-2, rtol=2e-2)
    assert jnp.allclose(lse_r[:, 0], jax.nn.logsumexp(ref2, axis=-1), atol=1e-2, rtol=1e-3)

    print("KERNEL_OK")
</pallas_src>

<mosaic_0001>
module attributes {stable_mosaic.version = 11 : i64} {
  func.func @_token_kernel(%arg0: i32, %arg1: i32, %arg2: memref<16x32xf32, #tpu.memory_space<vmem>>, %arg3: memref<32x32xbf16, #tpu.memory_space<vmem>>, %arg4: memref<1x32xf32, #tpu.memory_space<vmem>>, %arg5: memref<1x32xf32, #tpu.memory_space<vmem>>, %arg6: memref<1x32xf32, #tpu.memory_space<vmem>>, %arg7: memref<32x256xbf16, #tpu.memory_space<vmem>>, %arg8: memref<1x256xf32, #tpu.memory_space<vmem>>, %arg9: memref<16x256xbf16, #tpu.memory_space<vmem>>, %arg10: memref<16x1xf32, #tpu.memory_space<vmem>>, %arg11: memref<16x32xbf16, #tpu.memory_space<vmem>>, %arg12: memref<16x1xf32, #tpu.memory_space<vmem>>, %arg13: memref<16x1xf32, #tpu.memory_space<vmem>>) attributes {dimension_semantics = [#tpu.dimension_semantics<parallel>, #tpu.dimension_semantics<arbitrary>], iteration_bounds = array<i64: 1, 1>, scalar_prefetch = 0 : i64, scratch_operands = 3 : i64, tpu.core_type = #tpu.core_type<tc>, window_params = [{transform_indices = @transform_0, window_bounds = array<i64: 16, 32>}, {pipeline_mode = #tpu.pipeline_mode<synchronous>, transform_indices = @transform_1, window_bounds = array<i64: 32, 32>}, {pipeline_mode = #tpu.pipeline_mode<synchronous>, transform_indices = @transform_2, window_bounds = array<i64: 1, 32>}, {pipeline_mode = #tpu.pipeline_mode<synchronous>, transform_indices = @transform_3, window_bounds = array<i64: 1, 32>}, {pipeline_mode = #tpu.pipeline_mode<synchronous>, transform_indices = @transform_4, window_bounds = array<i64: 1, 32>}, {transform_indices = @transform_5, window_bounds = array<i64: 32, 256>}, {transform_indices = @transform_6, window_bounds = array<i64: 1, 256>}, {transform_indices = @transform_7, window_bounds = array<i64: 16, 256>}, {transform_indices = @transform_8, window_bounds = array<i64: 16, 1>}]} {
    %c0_i32 = arith.constant 0 : i32
    %0 = arith.cmpi eq, %arg1, %c0_i32 : i32
    %1 = arith.extui %0 : i1 to i32
    %c0_i32_0 = arith.constant 0 : i32
    %2 = arith.cmpi ne, %1, %c0_i32_0 : i32
    scf.if %2 {
      %c0_22 = arith.constant 0 : index
      %c0_23 = arith.constant 0 : index
      %31 = vector.load %arg2[%c0_22, %c0_23] : memref<16x32xf32, #tpu.memory_space<vmem>>, vector<16x32xf32>
      %32 = arith.truncf %31 : vector<16x32xf32> to vector<16x32xbf16>
      %c0_24 = arith.constant 0 : index
      %c0_25 = arith.constant 0 : index
      %33 = vector.load %arg3[%c0_24, %c0_25] : memref<32x32xbf16, #tpu.memory_space<vmem>>, vector<32x32xbf16>
      %cst_26 = arith.constant dense<0.000000e+00> : vector<16x32xf32>
      %34 = tpu.matmul %32, %33, %cst_26 {dimension_numbers = #tpu.dot_dimension_numbers<[1], [0], [0], [1], [0, 0, 1, 1], [], []>} : vector<16x32xbf16>, vector<32x32xbf16>, vector<16x32xf32> -> vector<16x32xf32>
      %c0_27 = arith.constant 0 : index
      %c0_28 = arith.constant 0 : index
      %35 = vector.load %arg4[%c0_27, %c0_28] : memref<1x32xf32, #tpu.memory_space<vmem>>, vector<1x32xf32>
      %36 = vector.broadcast %35 : vector<1x32xf32> to vector<16x32xf32>
      %37 = arith.addf %34, %36 : vector<16x32xf32>
      %cst_29 = arith.constant 5.000000e-01 : f32
      %38 = vector.broadcast %cst_29 : f32 to vector<16x32xf32>
      %39 = arith.mulf %37, %38 : vector<16x32xf32>
      %cst_30 = arith.constant 0.707106769 : f32
      %40 = vector.broadcast %cst_30 : f32 to vector<16x32xf32>
      %41 = arith.mulf %37, %40 : vector<16x32xf32>
      %42 = math.erf %41 : vector<16x32xf32>
      %cst_31 = arith.constant 1.000000e+00 : f32
      %43 = vector.broadcast %cst_31 : f32 to vector<16x32xf32>
      %44 = arith.addf %43, %42 : vector<16x32xf32>
      %45 = arith.mulf %39, %44 : vector<16x32xf32>
      %c0_32 = arith.constant 0 : index
      %c0_33 = arith.constant 0 : index
      %46 = vector.load %arg5[%c0_32, %c0_33] : memref<1x32xf32, #tpu.memory_space<vmem>>, vector<1x32xf32>
      %c0_34 = arith.constant 0 : index
      %c0_35 = arith.constant 0 : index
      %47 = vector.load %arg6[%c0_34, %c0_35] : memref<1x32xf32, #tpu.memory_space<vmem>>, vector<1x32xf32>
      %cst_36 = arith.constant dense<0.000000e+00> : vector<16xf32>
      %48 = vector.multi_reduction <add>, %45, %cst_36 [1] : vector<16x32xf32> to vector<16xf32>
      %49 = vector.shape_cast %48 : vector<16xf32> to vector<16x1xf32>
      %cst_37 = arith.constant 3.200000e+01 : f32
      %50 = vector.broadcast %cst_37 : f32 to vector<16x1xf32>
      %51 = arith.divf %49, %50 : vector<16x1xf32>
      %52 = vector.broadcast %51 : vector<16x1xf32> to vector<16x32xf32>
      %53 = arith.subf %45, %52 : vector<16x32xf32>
      %54 = arith.mulf %53, %53 : vector<16x32xf32>
      %cst_38 = arith.constant dense<0.000000e+00> : vector<16xf32>
      %55 = vector.multi_reduction <add>, %54, %cst_38 [1] : vector<16x32xf32> to vector<16xf32>
      %56 = vector.shape_cast %55 : vector<16xf32> to vector<16x1xf32>
      %cst_39 = arith.constant 3.200000e+01 : f32
      %57 = vector.broadcast %cst_39 : f32 to vector<16x1xf32>
      %58 = arith.divf %56, %57 : vector<16x1xf32>
      %59 = vector.broadcast %51 : vector<16x1xf32> to vector<16x32xf32>
      %60 = arith.subf %45, %59 : vector<16x32xf32>
      %cst_40 = arith.constant 9.99999996E-13 : f32
      %61 = vector.broadcast %cst_40 : f32 to vector<16x1xf32>
      %62 = arith.addf %58, %61 : vector<16x1xf32>
      %63 = math.rsqrt %62 : vector<16x1xf32>
      %64 = vector.broadcast %63 : vector<16x1xf32> to vector<16x32xf32>
      %65 = arith.mulf %60, %64 : vector<16x32xf32>
      %66 = vector.broadcast %46 : vector<1x32xf32> to vector<16x32xf32>
      %67 = arith.mulf %66, %65 : vector<16x32xf32>
      %68 = vector.broadcast %47 : vector<1x32xf32> to vector<16x32xf32>
      %69 = arith.addf %67, %68 : vector<16x32xf32>
      %70 = arith.truncf %69 : vector<16x32xf32> to vector<16x32xbf16>
      %c0_41 = arith.constant 0 : index
      %c0_42 = arith.constant 0 : index
      %71 = vector.load %arg11[%c0_41, %c0_42] : memref<16x32xbf16, #tpu.memory_space<vmem>>, vector<16x32xbf16>
      tpu.vector_store %arg11[%c0_41, %c0_42], %70 {strides = array<i32>} : memref<16x32xbf16, #tpu.memory_space<vmem>>, vector<16x32xbf16>,
      %cst_43 = arith.constant 0xFF800000 : f32
      %72 = vector.broadcast %cst_43 : f32 to vector<16x1xf32>
      %c0_44 = arith.constant 0 : index
      %c0_45 = arith.constant 0 : index
      %73 = vector.load %arg12[%c0_44, %c0_45] : memref<16x1xf32, #tpu.memory_space<vmem>>, vector<16x1xf32>
      tpu.vector_store %arg12[%c0_44, %c0_45], %72 {strides = array<i32>} : memref<16x1xf32, #tpu.memory_space<vmem>>, vector<16x1xf32>,
      %cst_46 = arith.constant 0.000000e+00 : f32
      %74 = vector.broadcast %cst_46 : f32 to vector<16x1xf32>
      %c0_47 = arith.constant 0 : index
      %c0_48 = arith.constant 0 : index
      %75 = vector.load %arg13[%c0_47, %c0_48] : memref<16x1xf32, #tpu.memory_space<vmem>>, vector<16x1xf32>
      tpu.vector_store %arg13[%c0_47, %c0_48], %74 {strides = array<i32>} : memref<16x1xf32, #tpu.memory_space<vmem>>, vector<16x1xf32>,
    } else {
    }
    %c0 = arith.constant 0 : index
    %c0_1 = arith.constant 0 : index
    %3 = vector.load %arg11[%c0, %c0_1] : memref<16x32xbf16, #tpu.memory_space<vmem>>, vector<16x32xbf16>
    %c0_2 = arith.constant 0 : index
    %c0_3 = arith.constant 0 : index
    %4 = vector.load %arg7[%c0_2, %c0_3] : memref<32x256xbf16, #tpu.memory_space<vmem>>, vector<32x256xbf16>
    %cst = arith.constant dense<0.000000e+00> : vector<16x256xf32>
    %5 = tpu.matmul %3, %4, %cst {dimension_numbers = #tpu.dot_dimension_numbers<[1], [0], [0], [1], [0, 0, 1, 1], [], []>} : vector<16x32xbf16>, vector<32x256xbf16>, vector<16x256xf32> -> vector<16x256xf32>
    %c0_4 = arith.constant 0 : index
    %c0_5 = arith.constant 0 : index
    %6 = vector.load %arg8[%c0_4, %c0_5] : memref<1x256xf32, #tpu.memory_space<vmem>>, vector<1x256xf32>
    %7 = vector.broadcast %6 : vector<1x256xf32> to vector<16x256xf32>
    %8 = arith.addf %5, %7 : vector<16x256xf32>
    %9 = arith.truncf %8 : vector<16x256xf32> to vector<16x256xbf16>
    %c0_6 = arith.constant 0 : index
    %c0_7 = arith.constant 0 : index
    %10 = vector.load %arg9[%c0_6, %c0_7] : memref<16x256xbf16, #tpu.memory_space<vmem>>, vector<16x256xbf16>
    tpu.vector_store %arg9[%c0_6, %c0_7], %9 {strides = array<i32>} : memref<16x256xbf16, #tpu.memory_space<vmem>>, vector<16x256xbf16>,
    %c0_8 = arith.constant 0 : index
    %c0_9 = arith.constant 0 : index
    %11 = vector.load %arg12[%c0_8, %c0_9] : memref<16x1xf32, #tpu.memory_space<vmem>>, vector<16x1xf32>
    %cst_10 = arith.constant dense<0xFF800000> : vector<16xf32>
    %12 = vector.multi_reduction <maximumf>, %8, %cst_10 [1] : vector<16x256xf32> to vector<16xf32>
    %13 = vector.shape_cast %12 : vector<16xf32> to vector<16x1xf32>
    %14 = arith.maximumf %11, %13 : vector<16x1xf32>
    %c0_11 = arith.constant 0 : index
    %c0_12 = arith.constant 0 : index
    %15 = vector.load %arg13[%c0_11, %c0_12] : memref<16x1xf32, #tpu.memory_space<vmem>>, vector<16x1xf32>
    %c0_13 = arith.constant 0 : index
    %c0_14 = arith.constant 0 : index
    %16 = vector.load %arg12[%c0_13, %c0_14] : memref<16x1xf32, #tpu.memory_space<vmem>>, vector<16x1xf32>
    %17 = arith.subf %16, %14 : vector<16x1xf32>
    %18 = math.exp %17 : vector<16x1xf32>
    %19 = arith.mulf %15, %18 : vector<16x1xf32>
    %20 = vector.broadcast %14 : vector<16x1xf32> to vector<16x256xf32>
    %21 = arith.subf %8, %20 : vector<16x256xf32>
    %22 = math.exp %21 : vector<16x256xf32>
    %cst_15 = arith.constant dense<0.000000e+00> : vector<16xf32>
    %23 = vector.multi_reduction <add>, %22, %cst_15 [1] : vector<16x256xf32> to vector<16xf32>
    %24 = vector.shape_cast %23 : vector<16xf32> to vector<16x1xf32>
    %25 = arith.addf %19, %24 : vector<16x1xf32>
    %c0_16 = arith.constant 0 : index
    %c0_17 = arith.constant 0 : index
    %26 = vector.load %arg13[%c0_16, %c0_17] : memref<16x1xf32, #tpu.memory_space<vmem>>, vector<16x1xf32>
    tpu.vector_store %arg13[%c0_16, %c0_17], %25 {strides = array<i32>} : memref<16x1xf32, #tpu.memory_space<vmem>>, vector<16x1xf32>,
    %c0_18 = arith.constant 0 : index
    %c0_19 = arith.constant 0 : index
    %27 = vector.load %arg12[%c0_18, %c0_19] : memref<16x1xf32, #tpu.memory_space<vmem>>, vector<16x1xf32>
    tpu.vector_store %arg12[%c0_18, %c0_19], %14 {strides = array<i32>} : memref<16x1xf32, #tpu.memory_space<vmem>>, vector<16x1xf32>,
    %c0_i32_20 = arith.constant 0 : i32
    %28 = arith.cmpi eq, %arg1, %c0_i32_20 : i32
    %29 = arith.extui %28 : i1 to i32
    %c0_i32_21 = arith.constant 0 : i32
    %30 = arith.cmpi ne, %29, %c0_i32_21 : i32
    scf.if %30 {
      %c0_22 = arith.constant 0 : index
      %c0_23 = arith.constant 0 : index
      %31 = vector.load %arg12[%c0_22, %c0_23] : memref<16x1xf32, #tpu.memory_space<vmem>>, vector<16x1xf32>
      %c0_24 = arith.constant 0 : index
      %c0_25 = arith.constant 0 : index
      %32 = vector.load %arg13[%c0_24, %c0_25] : memref<16x1xf32, #tpu.memory_space<vmem>>, vector<16x1xf32>
      %33 = math.log %32 : vector<16x1xf32>
      %34 = arith.addf %31, %33 : vector<16x1xf32>
      %c0_26 = arith.constant 0 : index
      %c0_27 = arith.constant 0 : index
      %35 = vector.load %arg10[%c0_26, %c0_27] : memref<16x1xf32, #tpu.memory_space<vmem>>, vector<16x1xf32>
      tpu.vector_store %arg10[%c0_26, %c0_27], %34 {strides = array<i32>} : memref<16x1xf32, #tpu.memory_space<vmem>>, vector<16x1xf32>,
    } else {
    }
    return
  }
  func.func @transform_0(%arg0: i32, %arg1: i32) -> (i32, i32) {
    %c0_i32 = arith.constant 0 : i32
    %c0_i32_0 = arith.constant 0 : i32
    return %arg0, %c0_i32 : i32, i32
  }
  func.func @transform_1(%arg0: i32, %arg1: i32) -> (i32, i32) {
    %c0_i32 = arith.constant 0 : i32
    %c0_i32_0 = arith.constant 0 : i32
    %c0_i32_1 = arith.constant 0 : i32
    return %c0_i32, %c0_i32_0 : i32, i32
  }
  func.func @transform_2(%arg0: i32, %arg1: i32) -> (i32, i32) {
    %c0_i32 = arith.constant 0 : i32
    %c0_i32_0 = arith.constant 0 : i32
    %c0_i32_1 = arith.constant 0 : i32
    return %c0_i32, %c0_i32_0 : i32, i32
  }
  func.func @transform_3(%arg0: i32, %arg1: i32) -> (i32, i32) {
    %c0_i32 = arith.constant 0 : i32
    %c0_i32_0 = arith.constant 0 : i32
    %c0_i32_1 = arith.constant 0 : i32
    return %c0_i32, %c0_i32_0 : i32, i32
  }
  func.func @transform_4(%arg0: i32, %arg1: i32) -> (i32, i32) {
    %c0_i32 = arith.constant 0 : i32
    %c0_i32_0 = arith.constant 0 : i32
    %c0_i32_1 = arith.constant 0 : i32
    return %c0_i32, %c0_i32_0 : i32, i32
  }
  func.func @transform_5(%arg0: i32, %arg1: i32) -> (i32, i32) {
    %c0_i32 = arith.constant 0 : i32
    %c0_i32_0 = arith.constant 0 : i32
    return %c0_i32, %arg1 : i32, i32
  }
  func.func @transform_6(%arg0: i32, %arg1: i32) -> (i32, i32) {
    %c0_i32 = arith.constant 0 : i32
    %c0_i32_0 = arith.constant 0 : i32
    return %c0_i32, %arg1 : i32, i32
  }
  func.func @transform_7(%arg0: i32, %arg1: i32) -> (i32, i32) {
    %c0_i32 = arith.constant 0 : i32
    return %arg0, %arg1 : i32, i32
  }
  func.func @transform_8(%arg0: i32, %arg1: i32) -> (i32, i32) {
    %c0_i32 = arith.constant 0 : i32
    %c0_i32_0 = arith.constant 0 : i32
    return %arg0, %c0_i32 : i32, i32
  }
}

</mosaic_0001>

<llo_original>
// kernel: abseq_concate_head_forward.1
$region0: #{abseq_concate_head_forward.1}
  #allocation0 [shape = 'u32[]', space=smem, size = 0x4, offset = 0x4, fixed_abs, tag = 'smem constant byte address 0x4 - core index']
  #allocation1 [shape = 'u32[72,128]{1,0:T(1,128)}', space=vmem, size = 0x9000, scoped, tag = 'internal scratch']
  #allocation2 [shape = 'bf16[16,32]{1,0:T(8,128)(2,1)}', space=vmem, size = 0x1000, scoped, tag = 'scratch operand']
  #allocation3 [shape = 'f32[16,1]{1,0:T(8,128)}', space=vmem, size = 0x2000, scoped, tag = 'scratch operand']
  #allocation4 [shape = 'f32[16,1]{1,0:T(8,128)}', space=vmem, size = 0x2000, scoped, tag = 'scratch operand']
  %s0 = inlined_call_operand.hbm [shape: f32[16,32], index: 0, kind: input, shape index: {}]
  %s1 = inlined_call_operand.hbm [shape: bf16[32,32], index: 1, kind: input, shape index: {}]
  %s2 = inlined_call_operand.vmem [shape: f32[1,32], index: 2, kind: input, shape index: {}]
  %s3 = inlined_call_operand.vmem [shape: f32[1,32], index: 3, kind: input, shape index: {}]
  %s4 = inlined_call_operand.vmem [shape: f32[1,32], index: 4, kind: input, shape index: {}]
  %s5 = inlined_call_operand.hbm [shape: bf16[32,256], index: 5, kind: input, shape index: {}]
  %s6 = inlined_call_operand.vmem [shape: f32[1,256], index: 6, kind: input, shape index: {}]
  %s7 = inlined_call_operand.vmem [shape: bf16[16,256], index: 7, kind: output, shape index: {0}]
  %s8 = inlined_call_operand.vmem [shape: f32[16,1], index: 8, kind: output, shape index: {1}]
  %9 = xla_tuple %s7, %s8
  %s10 = sld [smem:[#allocation0]]
  $region66: #{abseq_concate_head_forward.1} parent=0
    _
  %s12 = ssub.s32 1, %s10
  %s13 = scalar_select 0, %s12, %s10
  $region1: #{abseq_concate_head_forward.1} parent=0
    #allocation5 [shape = 'u8[8192]{0}', space=vmem, size = 0x2000, scoped, tag = 'input window, operand 0, single buffered']
    #allocation6 [shape = 's32[1]{0}', space=sflag, size = 0x4, scoped, tag = 'scoped memory for abseq_concate_head_forward.1']
    #allocation7 [shape = 'u8[8192]{0}', space=vmem, size = 0x2000, scoped, tag = 'input window, operand 1, single buffered']
    #allocation8 [shape = 's32[1]{0}', space=sflag, size = 0x4, scoped, tag = 'scoped memory for abseq_concate_head_forward.1']
    #allocation9 [shape = 'u8[16384]{0}', space=vmem, size = 0x4000, scoped, tag = 'input window, operand 5, single buffered']
    %14 = vsyncpa [#allocation6], 0
    %15 = vsyncpa [#allocation8], 0
    // Predicated region
    $region2: #{abseq_concate_head_forward.1} parent=1 // pred_check
      _
    $region3: #{abseq_concate_head_forward.1} parent=1 // pred_check_branch
      %17 = sbr.rel (0) target = $region5
    $region4: #{abseq_concate_head_forward.1} parent=1 // pred_region
      %19 = vsyncadd [#allocation6], 0
      %s20 = sshll.u32 %s0, 4
      %s21 = int_to_ptr.hbm [resolvable:$true] %s20
      %s22 = sshll.u32 [#allocation5], 4
      %s23 = int_to_ptr.vmem [resolvable:$true] %s22
      %28 = dma.hbm_to_vmem [thread:$0]  %s21, 256, %s23, [#allocation6], 128, 128, 8
    $region5: #{abseq_concate_head_forward.1} parent=1 // pred_fallthru
      _
    // Predicated region
    $region6: #{abseq_concate_head_forward.1} parent=1 // pred_check
      _
    $region7: #{abseq_concate_head_forward.1} parent=1 // pred_check_branch
      %30 = sbr.rel (0) target = $region9
    $region8: #{abseq_concate_head_forward.1} parent=1 // pred_region
      %32 = vsyncadd [#allocation8], 0
      %s33 = sshll.u32 %s1, 4
      %s34 = int_to_ptr.hbm [resolvable:$true] %s33
      %s35 = sshll.u32 [#allocation7], 4
      %s36 = int_to_ptr.vmem [resolvable:$true] %s35
      %41 = dma.hbm_to_vmem [thread:$0]  %s34, 256, %s36, [#allocation8], 64, 64, 4
    $region9: #{abseq_concate_head_forward.1} parent=1 // pred_fallthru
      _
    // Predicated region
    $region10: #{abseq_concate_head_forward.1} parent=1 // pred_check
      _
    $region11: #{abseq_concate_head_forward.1} parent=1 // pred_check_branch
      %43 = sbr.rel (0) target = $region13
    $region12: #{abseq_concate_head_forward.1} parent=1 // pred_region
      _
    $region13: #{abseq_concate_head_forward.1} parent=1 // pred_fallthru
      _
    // Predicated region
    $region14: #{abseq_concate_head_forward.1} parent=1 // pred_check
      _
    $region15: #{abseq_concate_head_forward.1} parent=1 // pred_check_branch
      %45 = sbr.rel (0) target = $region17
    $region16: #{abseq_concate_head_forward.1} parent=1 // pred_region
      _
    $region17: #{abseq_concate_head_forward.1} parent=1 // pred_fallthru
      _
    // Predicated region
    $region18: #{abseq_concate_head_forward.1} parent=1 // pred_check
      _
    $region19: #{abseq_concate_head_forward.1} parent=1 // pred_check_branch
      %47 = sbr.rel (0) target = $region21
    $region20: #{abseq_concate_head_forward.1} parent=1 // pred_region
      _
    $region21: #{abseq_concate_head_forward.1} parent=1 // pred_fallthru
      _
    // Predicated region
    $region22: #{abseq_concate_head_forward.1} parent=1 // pred_check
      _
    $region23: #{abseq_concate_head_forward.1} parent=1 // pred_check_branch
      %49 = sbr.rel (0) target = $region25
    $region24: #{abseq_concate_head_forward.1} parent=1 // pred_region
      %51 = vsyncadd [#allocation8], 0
      %s52 = sshll.u32 %s5, 4
      %s53 = int_to_ptr.hbm [resolvable:$true] %s52
      %s54 = sshll.u32 [#allocation9], 4
      %s55 = int_to_ptr.vmem [resolvable:$true] %s54
      %60 = dma.hbm_to_vmem [thread:$0]  %s53, 512, %s55, [#allocation8], 128, 128, 8
    $region25: #{abseq_concate_head_forward.1} parent=1 // pred_fallthru
      _
    // Predicated region
    $region26: #{abseq_concate_head_forward.1} parent=1 // pred_check
      _
    $region27: #{abseq_concate_head_forward.1} parent=1 // pred_check_branch
      %62 = sbr.rel (0) target = $region29
    $region28: #{abseq_concate_head_forward.1} parent=1 // pred_region
      _
    $region29: #{abseq_concate_head_forward.1} parent=1 // pred_fallthru
      _
    // Predicated region
    $region30: #{abseq_concate_head_forward.1} parent=1 // pred_check
      _
    $region31: #{abseq_concate_head_forward.1} parent=1 // pred_check_branch
      %64 = sbr.rel (0) target = $region33
    $region32: #{abseq_concate_head_forward.1} parent=1 // pred_region
      %66 = dma.done [#allocation6], 256
    $region33: #{abseq_concate_head_forward.1} parent=1 // pred_fallthru
      _
    // Predicated region
    $region34: #{abseq_concate_head_forward.1} parent=1 // pred_check
      _
    $region35: #{abseq_concate_head_forward.1} parent=1 // pred_check_branch
      %68 = sbr.rel (0) target = $region37
    $region36: #{abseq_concate_head_forward.1} parent=1 // pred_region
      %70 = dma.done [#allocation8], 256
    $region37: #{abseq_concate_head_forward.1} parent=1 // pred_fallthru
      _
    // Predicated region
    $region38: #{abseq_concate_head_forward.1} parent=1 // pred_check
      _
    $region39: #{abseq_concate_head_forward.1} parent=1 // pred_check_branch
      %72 = sbr.rel (0) target = $region41
    $region40: #{abseq_concate_head_forward.1} parent=1 // pred_region
      %74 = dma.done [#allocation8], 512
    $region41: #{abseq_concate_head_forward.1} parent=1 // pred_fallthru
      _
    %p76 = scmp.eq.s32.totalorder 0, 0
    // Predicated region
    $region42: #{abseq_concate_head_forward.1} parent=1 // pred_check
      %p77 = pneg %p76
    $region43: #{abseq_concate_head_forward.1} parent=1 // pred_check_branch
      %79 = sbr.rel (%p77) target = $region45
    $region44: #{abseq_concate_head_forward.1} parent=1 // pred_region
      %v80 = vld [vmem:[#allocation5] sm:$0xff]
      %v81 = vld [vmem:[#allocation5 + $0x8] sm:$0xff]
      %v82 = vpack.c.bf16 %v81, %v80
      %v83 = vld [vmem:[#allocation7] sm:$0xf]
      %v84 = vld [vmem:[#allocation7 + $0x4] sm:$0xf]
      %v85 = vld [vmem:[#allocation7 + $0x8] sm:$0xf]
      %v86 = vld [vmem:[#allocation7 + $0xc] sm:$0xf]
      %v87 = vld [vmem:[%s2] sm:$0x1]
      %v89 = vperm.slane %v87, 0
      %v95 = vunpack.c.l.b16 %v83
      %v96 = vunpack.c.l.b16 %v84
      %v97 = vunpack.c.l.b16 %v85
      %v98 = vunpack.c.l.b16 %v86
      %v99 = vpack.c.b16 %v96, %v95
      %v100 = vpack.c.b16 %v98, %v97
      %vm103 = vcmask 261120
      %v105 = vsel %vm103, %v82, 0
      %107 = vmatpush.bf16.msra.mxu0 0
      %108 = vmatpush.bf16.msra.mxu0 0
      %109 = vmatpush.bf16.msra.mxu0 0
      %110 = vmatpush.bf16.msra.mxu0 0
      %111 = vmatpush.bf16.msra.mxu0 0
      %112 = vmatpush.bf16.msra.mxu0 0
      %113 = vmatpush.bf16.msra.mxu0 %v100
      %114 = vmatpush.bf16.msra.mxu0 %v99
      %115 = vmatmul.bf16.gmra.mxu0 %v105
      %v116 = vpop.f32.mrf.mxu0
      %v117 = vadd.f32 %v89, %v116
      %v118 = vpop.f32.mrf.mxu0
      %v119 = vadd.f32 %v89, %v118
      %120 = vdwg.mxu0
      %v121 = vmul.f32 %v117, 0.5
      %v122 = vmul.f32 %v119, 0.5
      %v123 = vmul.f32 %v117, 0.70710677
      %v124 = vmul.f32 %v119, 0.70710677
      %v125 = vmul.f32 %v123, %v123
      %v126 = vmin.f32 16.0, %v125
      %v127 = vmul.f32 %v126, 2.1237322e-06
      %v128 = vadd.f32 %v127, 0.00028619796
      %v129 = vmul.f32 %v126, %v128
      %v130 = vadd.f32 %v129, 0.0036580483
      %v131 = vmul.f32 %v126, %v130
      %v132 = vadd.f32 %v131, 0.05243302
      %v133 = vmul.f32 %v126, %v132
      %v134 = vadd.f32 %v133, 0.18741608
      %v135 = vmul.f32 %v126, %v134
      %v136 = vadd.f32 %v135, 1.1283791
      %v137 = vmul.f32 %v123, %v136
      %v138 = vmul.f32 %v126, 3.8918573e-05
      %v139 = vadd.f32 %v138, 0.001143296
      %v140 = vmul.f32 %v126, %v139
      %v141 = vadd.f32 %v140, 0.014752088
      %v142 = vmul.f32 %v126, %v141
      %v143 = vadd.f32 %v142, 0.112945676
      %v144 = vmul.f32 %v126, %v143
      %v145 = vadd.f32 %v144, 0.4994258
      %v146 = vmul.f32 %v126, %v145
      %v147 = vadd.f32 %v146, 1.0
      %v148 = vrcp.pop %v147
      %v149 = vmul.f32 %v147, %v148
      %v150 = vsub.f32 1.0, %v149
      %v151 = vmul.f32 %v148, %v150
      %v152 = vadd.f32 %v148, %v151
      %vm153 = vweird.f32 %v147
      %vm154 = vweird.f32 %v148
      %vm155 = vmor %vm153, %vm154
      %v156 = vsel %vm155, %v148, %v152
      %v157 = vand.u32 2147483647, %v147
      %vm158 = vcmp.eq.f32.partialorder %v157, 8.507059e+37
      %v159 = vand.u32 %v147, 2147483648
      %v160 = vor.u32 1.1754944e-38, %v159
      %v161 = vsel %vm158, %v160, %v156
      %v162 = vmul.f32 %v137, %v161
      %v163 = vmin.f32 %v162, 1.0
      %v164 = vmax.f32 %v163, -1.0
      %v165 = vmul.f32 %v124, %v124
      %v166 = vmin.f32 16.0, %v165
      %v167 = vmul.f32 %v166, 2.1237322e-06
      %v168 = vadd.f32 %v167, 0.00028619796
      %v169 = vmul.f32 %v166, %v168
      %v170 = vadd.f32 %v169, 0.0036580483
      %v171 = vmul.f32 %v166, %v170
      %v172 = vadd.f32 %v171, 0.05243302
      %v173 = vmul.f32 %v166, %v172
      %v174 = vadd.f32 %v173, 0.18741608
      %v175 = vmul.f32 %v166, %v174
      %v176 = vadd.f32 %v175, 1.1283791
      %v177 = vmul.f32 %v124, %v176
      %v178 = vmul.f32 %v166, 3.8918573e-05
      %v179 = vadd.f32 %v178, 0.001143296
      %v180 = vmul.f32 %v166, %v179
      %v181 = vadd.f32 %v180, 0.014752088
      %v182 = vmul.f32 %v166, %v181
      %v183 = vadd.f32 %v182, 0.112945676
      %v184 = vmul.f32 %v166, %v183
      %v185 = vadd.f32 %v184, 0.4994258
      %v186 = vmul.f32 %v166, %v185
      %v187 = vadd.f32 %v186, 1.0
      %v188 = vrcp.pop %v187
      %v189 = vmul.f32 %v187, %v188
      %v190 = vsub.f32 1.0, %v189
      %v191 = vmul.f32 %v188, %v190
      %v192 = vadd.f32 %v188, %v191
      %vm193 = vweird.f32 %v187
      %vm194 = vweird.f32 %v188
      %vm195 = vmor %vm193, %vm194
      %v196 = vsel %vm195, %v188, %v192
      %v197 = vand.u32 2147483647, %v187
      %vm198 = vcmp.eq.f32.partialorder %v197, 8.507059e+37
      %v199 = vand.u32 %v187, 2147483648
      %v200 = vor.u32 1.1754944e-38, %v199
      %v201 = vsel %vm198, %v200, %v196
      %v202 = vmul.f32 %v177, %v201
      %v203 = vmin.f32 %v202, 1.0
      %v204 = vmax.f32 %v203, -1.0
      %v205 = vadd.f32 %v164, 1.0
      %v206 = vadd.f32 %v204, 1.0
      %v207 = vmul.f32 %v121, %v205
      %v208 = vmul.f32 %v122, %v206
      %v209 = vld [vmem:[%s3] sm:$0x1]
      %v210 = vld [vmem:[%s4] sm:$0x1]
      %v211 = vsel %vm103, %v207, 0.0
      %212 = vadd.xlane.f32.xlu0 %v211
      %v213 = vpop.xlane.xlu0 %212
      %v214 = vsel %vm103, %v208, 0.0
      %215 = vadd.xlane.f32.xlu0 %v214
      %v216 = vpop.xlane.xlu0 %215
      %v217 = vrcp.pop 32.0
      %v218 = vmul.f32 32.0, %v217
      %v219 = vsub.f32 1.0, %v218
      %v220 = vmul.f32 %v217, %v219
      %v221 = vadd.f32 %v217, %v220
      %vm222 = vweird.f32 %v217
      %v223 = vsel %vm222, %v217, %v221
      %v224 = vmul.f32 %v213, %v223
      %v225 = vmul.f32 %v216, %v223
      %v226 = vsub.f32 %v207, %v224
      %v227 = vsub.f32 %v208, %v225
      %v228 = vmul.f32 %v226, %v226
      %v229 = vmul.f32 %v227, %v227
      %v230 = vsel %vm103, %v228, 0.0
      %231 = vadd.xlane.f32.xlu0 %v230
      %v232 = vpop.xlane.xlu0 %231
      %v233 = vsel %vm103, %v229, 0.0
      %234 = vadd.xlane.f32.xlu0 %v233
      %v235 = vpop.xlane.xlu0 %234
      %v236 = vmul.f32 %v232, %v223
      %v237 = vmul.f32 %v235, %v223
      %v238 = vadd.f32 %v236, 1e-12
      %v239 = vadd.f32 %v237, 1e-12
      %v240 = vrsqrt.pop %v238
      %v241 = vmul.f32 %v240, %v238
      %v242 = vmul.f32 %v241, %v240
      %v243 = vmul.f32 0.5, %v242
      %v244 = vsub.f32 1.5, %v243
      %v245 = vmul.f32 %v240, %v244
      %vm246 = vweird.f32 %v238
      %vm247 = vweird.f32 %v240
      %vm248 = vmor %vm246, %vm247
      %v249 = vsel %vm248, %v240, %v245
      %v250 = vrsqrt.pop %v239
      %v251 = vmul.f32 %v250, %v239
      %v252 = vmul.f32 %v251, %v250
      %v253 = vmul.f32 0.5, %v252
      %v254 = vsub.f32 1.5, %v253
      %v255 = vmul.f32 %v250, %v254
      %vm256 = vweird.f32 %v239
      %vm257 = vweird.f32 %v250
      %vm258 = vmor %vm256, %vm257
      %v259 = vsel %vm258, %v250, %v255
      %v260 = vmul.f32 %v226, %v249
      %v261 = vmul.f32 %v227, %v259
      %v263 = vperm.slane %v209, 0
      %v265 = vmul.f32 %v263, %v260
      %v266 = vmul.f32 %v263, %v261
      %v268 = vperm.slane %v210, 0
      %v270 = vadd.f32 %v265, %v268
      %v271 = vadd.f32 %v266, %v268
      %v272 = vpack.c.bf16 %v270, %v270
      %v273 = vpack.c.bf16 %v271, %v271
      %vm274 = vcmask 257024
      %275 = vst.msk [vmem:[#allocation2] sm:$0xf] %vm274, %v272
      %276 = vst.msk [vmem:[#allocation2 + $0x4] sm:$0xf] %vm274, %v273
      %vm277 = vcmask 7168
      %278 = vst.msk [vmem:[#allocation3] sm:$0xff] %vm277, -inf
      %279 = vst.msk [vmem:[#allocation3 + $0x8] sm:$0xff] %vm277, -inf
      %280 = vst.msk [vmem:[#allocation4] sm:$0xff] %vm277, 0.0
      %281 = vst.msk [vmem:[#allocation4 + $0x8] sm:$0xff] %vm277, 0.0
    $region45: #{abseq_concate_head_forward.1} parent=1 // pred_fallthru
      _
    %v282 = vld [vmem:[#allocation2] sm:$0xf]
    %v283 = vld [vmem:[#allocation2 + $0x4] sm:$0xf]
    %v284 = vld [vmem:[#allocation9] sm:$0xff]
    %v285 = vld [vmem:[#allocation9 + $0x8] sm:$0xff]
    %v286 = vld [vmem:[#allocation9 + $0x10] sm:$0xff]
    %v287 = vld [vmem:[#allocation9 + $0x18] sm:$0xff]
    %v288 = vld [vmem:[%s6] sm:$0x3]
    %v290 = vperm.slane %v288, 0
    %v291 = vperm.slane %v288, 1
    %v296 = vunpack.c.l.b16 %v282
    %v297 = vunpack.c.l.b16 %v283
    %v298 = vpack.c.b16 %v297, %v296
    %v303 = vunpack.c.l.b16 %v284
    %v304 = vunpack.c.h.b16 %v284
    %v305 = vunpack.c.l.b16 %v285
    %v306 = vunpack.c.h.b16 %v285
    %v307 = vunpack.c.l.b16 %v286
    %v308 = vunpack.c.h.b16 %v286
    %v309 = vunpack.c.l.b16 %v287
    %v310 = vunpack.c.h.b16 %v287
    %v311 = vpack.c.b16 %v305, %v303
    %v312 = vpack.c.b16 %v306, %v304
    %v313 = vpack.c.b16 %v309, %v307
    %v314 = vpack.c.b16 %v310, %v308
    %vm319 = vcmask 261120
    %v321 = vsel %vm319, %v298, 0
    %323 = vmatpush.bf16.msra.mxu0 0
    %324 = vmatpush.bf16.msra.mxu0 0
    %325 = vmatpush.bf16.msra.mxu0 0
    %326 = vmatpush.bf16.msra.mxu0 0
    %327 = vmatpush.bf16.msra.mxu0 0
    %328 = vmatpush.bf16.msra.mxu0 0
    %329 = vmatpush.bf16.msra.mxu0 %v313
    %330 = vmatpush.bf16.msra.mxu0 %v311
    %331 = vmatmul.bf16.gmra.mxu0 %v321
    %v332 = vpop.f32.mrf.mxu0
    %v333 = vadd.f32 %v290, %v332
    %v334 = vpop.f32.mrf.mxu0
    %v335 = vadd.f32 %v290, %v334
    %336 = vdwg.mxu0
    %337 = vmatpush.bf16.msra.mxu0 0
    %338 = vmatpush.bf16.msra.mxu0 0
    %339 = vmatpush.bf16.msra.mxu0 0
    %340 = vmatpush.bf16.msra.mxu0 0
    %341 = vmatpush.bf16.msra.mxu0 0
    %342 = vmatpush.bf16.msra.mxu0 0
    %343 = vmatpush.bf16.msra.mxu0 %v314
    %344 = vmatpush.bf16.msra.mxu0 %v312
    %345 = vmatmul.bf16.gmra.mxu0 %v321
    %v346 = vpop.f32.mrf.mxu0
    %v347 = vadd.f32 %v291, %v346
    %v348 = vpop.f32.mrf.mxu0
    %v349 = vadd.f32 %v291, %v348
    %350 = vdwg.mxu0
    %v351 = vpack.c.bf16 %v347, %v333
    %v352 = vpack.c.bf16 %v349, %v335
    %353 = vst [vmem:[%s7] sm:$0xff] %v351
    %354 = vst [vmem:[%s7 + $0x8] sm:$0xff] %v352
    %v355 = vld [vmem:[#allocation3] sm:$0xff]
    %v356 = vld [vmem:[#allocation3 + $0x8] sm:$0xff]
    %v357 = vmax.f32 %v333, %v347
    %358 = vmax.xlane.f32.xlu0 %v357
    %v359 = vpop.xlane.xlu0 %358
    %v360 = vmax.f32 %v335, %v349
    %361 = vmax.xlane.f32.xlu0 %v360
    %v362 = vpop.xlane.xlu0 %361
    %v363 = vmax.f32 %v355, %v359
    %v364 = vmax.f32 %v356, %v362
    %v365 = vld [vmem:[#allocation4] sm:$0xff]
    %v366 = vld [vmem:[#allocation4 + $0x8] sm:$0xff]
    %v367 = vsub.f32 %v355, %v363
    %v368 = vsub.f32 %v356, %v364
    %v369 = vmul.f32 %v367, 1.442695
    %v370 = vpow.pop %v369
    %v371 = vmul.f32 %v368, 1.442695
    %v372 = vpow.pop %v371
    %v373 = vmul.f32 %v365, %v370
    %v374 = vmul.f32 %v366, %v372
    %376 = vset.pattern.permute.xlu0 0
    %377 = vperm.xlu0 %376, %v363
    %v378 = vpop.permute.xlu0 %377
    %381 = vset.pattern.permute.xlu0 0
    %382 = vperm.xlu0 %381, %v364
    %v383 = vpop.permute.xlu0 %382
    %v385 = vsub.f32 %v333, %v378
    %v386 = vsub.f32 %v347, %v378
    %v387 = vsub.f32 %v335, %v383
    %v388 = vsub.f32 %v349, %v383
    %v389 = vmul.f32 %v385, 1.442695
    %v390 = vpow.pop %v389
    %v391 = vmul.f32 %v386, 1.442695
    %v392 = vpow.pop %v391
    %v393 = vmul.f32 %v387, 1.442695
    %v394 = vpow.pop %v393
    %v395 = vmul.f32 %v388, 1.442695
    %v396 = vpow.pop %v395
    %v397 = vadd.f32 %v390, %v392
    %398 = vadd.xlane.f32.xlu0 %v397
    %v399 = vpop.xlane.xlu0 %398
    %v400 = vadd.f32 %v394, %v396
    %401 = vadd.xlane.f32.xlu0 %v400
    %v402 = vpop.xlane.xlu0 %401
    %v403 = vadd.f32 %v373, %v399
    %v404 = vadd.f32 %v374, %v402
    %vm405 = vcmask 7168
    %406 = vst.msk [vmem:[#allocation4] sm:$0xff] %vm405, %v403
    %407 = vst.msk [vmem:[#allocation4 + $0x8] sm:$0xff] %vm405, %v404
    %408 = vst.msk [vmem:[#allocation3] sm:$0xff] %vm405, %v363
    %409 = vst.msk [vmem:[#allocation3 + $0x8] sm:$0xff] %vm405, %v364
    // Predicated region
    $region46: #{abseq_concate_head_forward.1} parent=1 // pred_check
      %p410 = pneg %p76
    $region47: #{abseq_concate_head_forward.1} parent=1 // pred_check_branch
      %412 = sbr.rel (%p410) target = $region49
    $region48: #{abseq_concate_head_forward.1} parent=1 // pred_region
      %v413 = vld [vmem:[#allocation3] sm:$0xff]
      %v414 = vld [vmem:[#allocation3 + $0x8] sm:$0xff]
      %v415 = vld [vmem:[#allocation4] sm:$0xff]
      %v416 = vld [vmem:[#allocation4 + $0x8] sm:$0xff]
      %v417 = vlog2.pop %v415
      %v418 = vmul.f32 %v417, 0.6931472
      %v419 = vlog2.pop %v416
      %v420 = vmul.f32 %v419, 0.6931472
      %v421 = vadd.f32 %v413, %v418
      %v422 = vadd.f32 %v414, %v420
      %423 = vst.msk [vmem:[%s8] sm:$0xff] %vm405, %v421
      %424 = vst.msk [vmem:[%s8 + $0x8] sm:$0xff] %vm405, %v422
    $region49: #{abseq_concate_head_forward.1} parent=1 // pred_fallthru
      _
    // Predicated region
    $region50: #{abseq_concate_head_forward.1} parent=1 // pred_check
      _
    $region51: #{abseq_concate_head_forward.1} parent=1 // pred_check_branch
      %426 = sbr.rel (0) target = $region53
    $region52: #{abseq_concate_head_forward.1} parent=1 // pred_region
      _
    $region53: #{abseq_concate_head_forward.1} parent=1 // pred_fallthru
      _
    // Predicated region
    $region54: #{abseq_concate_head_forward.1} parent=1 // pred_check
      _
    $region55: #{abseq_concate_head_forward.1} parent=1 // pred_check_branch
      %428 = sbr.rel (0) target = $region57
    $region56: #{abseq_concate_head_forward.1} parent=1 // pred_region
      _
    $region57: #{abseq_concate_head_forward.1} parent=1 // pred_fallthru
      _
    // Predicated region
    $region58: #{abseq_concate_head_forward.1} parent=1 // pred_check
      _
    $region59: #{abseq_concate_head_forward.1} parent=1 // pred_check_branch
      %430 = sbr.rel (0) target = $region61
    $region60: #{abseq_concate_head_forward.1} parent=1 // pred_region
      _
    $region61: #{abseq_concate_head_forward.1} parent=1 // pred_fallthru
      _
    // Predicated region
    $region62: #{abseq_concate_head_forward.1} parent=1 // pred_check
      _
    $region63: #{abseq_concate_head_forward.1} parent=1 // pred_check_branch
      %432 = sbr.rel (0) target = $region65
    $region64: #{abseq_concate_head_forward.1} parent=1 // pred_region
      _
    $region65: #{abseq_concate_head_forward.1} parent=1 // pred_fallthru
      _
    %433 = vsyncpa [#allocation6], 1
    %434 = vsyncpa [#allocation8], 1

</llo_original>
